<compile_context>
chip_gen: v7x
topology: tpu7x:2x2x1
jax: 0.10.0
libtpu: 0.0.40
codegen_flags: <defaults>
</compile_context>

<pallas_src>
import functools

import jax
import jax.numpy as jnp
from jax.experimental import pallas as pl
from jax.experimental.pallas import tpu as pltpu

ALPHA = 1.0
MXU_DTYPE = jnp.bfloat16     # operand dtype for the 4 dense-layer matmuls (f32 accumulate)
LANE = 128
SUBLANE = 8
TB_MAX = 1024                # big tiles: measured ~85% of HBM roofline vs ~63% at 256


def _round_up(v, m):
    return (v + m - 1) // m * m


def _dec_kernel(x_ref,
                ew1_ref, eb1_ref, ew2_ref, eb2_ref,     # encoder params
                cwt_ref, cw_sq_ref,                     # cluster centers^T (F,K), ||mu||^2 (1,K)
                dw1_ref, db1_ref, dw2_ref, db2_ref,     # decoder params
                fc_ref,                                 # merged output slab (TB, W)
                *, d_in, n_feat, n_clust):
    # ---------------- encoder: Linear -> ReLU -> Linear (bf16 MXU, f32 acc) ----------------
    xb = x_ref[...].astype(MXU_DTYPE)
    h = jnp.dot(xb, ew1_ref[...], preferred_element_type=jnp.float32) + eb1_ref[...]
    h = jnp.maximum(h, 0.0)
    feats = jnp.dot(h.astype(MXU_DTYPE), ew2_ref[...],
                    preferred_element_type=jnp.float32) + eb2_ref[...]        # (TB, F) f32

    # ---------------- clustering layer (Student's t soft assignment, all f32) --------------
    # ||f - mu||^2 = ||f||^2 - 2 f.mu + ||mu||^2, clamped at 0 against FP cancellation.
    f_sq = jnp.sum(feats * feats, axis=1, keepdims=True)                      # (TB, 1)
    cross = jnp.dot(feats, cwt_ref[...], preferred_element_type=jnp.float32)  # (TB, K), f32 dot (tiny)
    dist = jnp.maximum(f_sq - 2.0 * cross + cw_sq_ref[...], 0.0)              # (TB, K)
    if ALPHA != 1.0:                     # static branch: no pow/div emitted for alpha == 1
        q = 1.0 / (1.0 + dist / ALPHA)
        q = q ** ((ALPHA + 1.0) / 2.0)
    else:
        q = 1.0 / (1.0 + dist)
    q = q / jnp.sum(q, axis=1, keepdims=True)            # exact normalization (rows sum to 1)

    # ---------------- decoder: Linear -> ReLU -> Linear ----------------
    hd = jnp.dot(feats.astype(MXU_DTYPE), dw1_ref[...],
                 preferred_element_type=jnp.float32) + db1_ref[...]
    hd = jnp.maximum(hd, 0.0)
    out = jnp.dot(hd.astype(MXU_DTYPE), dw2_ref[...],
                  preferred_element_type=jnp.float32) + db2_ref[...]          # (TB, D)

    # ---------------- merged lane-dense output slab: [recon | feats | q | unused] ----------
    fc_ref[:, :d_in] = out
    fc_ref[:, d_in:d_in + n_feat] = feats
    fc_ref[:, d_in + n_feat:d_in + n_feat + n_clust] = q
    # lanes beyond d_in+n_feat+n_clust are never read back (sliced off by the wrapper)


@jax.jit
def deep_embedded_clustering(x, params):
    B, D = x.shape
    H = params["ew1"].shape[1]
    F = params["ew2"].shape[1]
    K = params["cw"].shape[0]
    W = _round_up(D + F + K, LANE)       # single lane-dense output slab width

    # ---- batch tiling: large tiles, >=2 grid steps when possible (v7x dual-TC sharding) ----
    if B <= SUBLANE:
        TB = B                                                # block == full batch dim
    else:
        TB = min(TB_MAX, _round_up(pl.cdiv(B, 2), SUBLANE))
    num_tiles = pl.cdiv(B, TB)                                # partial last tile, no host pad

    # ---- parameters at natural (unpadded) shapes; matmul weights cast to bf16 once ----
    f32 = lambda a: a.astype(jnp.float32)
    mxu = lambda a: a.astype(MXU_DTYPE)
    ew1, eb1 = mxu(params["ew1"]), f32(params["eb1"])
    ew2, eb2 = mxu(params["ew2"]), f32(params["eb2"])
    cw = f32(params["cw"])
    cwt = cw.T                                                # (F, K)
    cw_sq = jnp.sum(cw * cw, axis=1)[None, :]                 # (1, K)
    dw1, db1 = mxu(params["dw1"]), f32(params["db1"])
    dw2, db2 = mxu(params["dw2"]), f32(params["db2"])

    # ---- VMEM budget: resident weights (double-buffered by the pipeline) + tiles + temps ----
    param_bytes = (2 * (D * H + H * F + F * H + H * D)        # bf16 weights
                   + 4 * (2 * H + F + D)                      # f32 biases
                   + 4 * (F * K + K))                         # f32 cluster centers
    io_bytes = 2 * 4 * TB * (D + W)                           # double-buffered x tile + out slab
    scratch_bytes = 4 * TB * (2 * H + 2 * F + K + D) + 2 * TB * (D + 2 * H + F)
    vmem_limit = int(min(2 * param_bytes + io_bytes + scratch_bytes + (8 << 20), 64 << 20))

    flops = 2 * B * (D * H + H * F + F * K + F * H + H * D)
    bytes_accessed = param_bytes + 4 * B * (D + W)

    kernel = functools.partial(_dec_kernel, d_in=D, n_feat=F, n_clust=K)

    def wspec(shape):
        # full-array block, constant index_map -> stays VMEM-resident across grid steps
        return pl.BlockSpec(shape, lambda i: (0, 0))

    fc = pl.pallas_call(
        kernel,
        out_shape=jax.ShapeDtypeStruct((B, W), jnp.float32),
        grid=(num_tiles,),
        in_specs=[
            pl.BlockSpec((TB, D), lambda i: (i, 0)),          # x: tiled over batch
            wspec((D, H)), wspec((1, H)), wspec((H, F)), wspec((1, F)),
            wspec((F, K)), wspec((1, K)),
            wspec((F, H)), wspec((1, H)), wspec((H, D)), wspec((1, D)),
        ],
        out_specs=pl.BlockSpec((TB, W), lambda i: (i, 0)),
        compiler_params=pltpu.CompilerParams(
            dimension_semantics=("parallel",),                # shards batch tiles across TCs on v7x
            vmem_limit_bytes=vmem_limit,
        ),
        cost_estimate=pl.CostEstimate(
            flops=flops, transcendentals=0, bytes_accessed=bytes_accessed),
    )(x, ew1, eb1, ew2, eb2, cwt, cw_sq, dw1, db1, dw2, db2)

    # unpack the merged slab back into the three logical outputs
    output = fc[:, :D]
    features = fc[:, D:D + F]
    clusters = fc[:, D + F:D + F + K]
    return output, features, clusters


# ----------------------------- parameter init & reference -----------------------------

def _xavier_uniform(key, shape):
    fan_out, fan_in = shape
    bound = (6.0 / (fan_in + fan_out)) ** 0.5
    return jax.random.uniform(key, shape, jnp.float32, -bound, bound)


def init_params(key, input_dim, hidden, num_features, num_clusters):
    ks = jax.random.split(key, 5)
    return {
        # encoder: D -> H -> F
        "ew1": jax.random.normal(ks[0], (input_dim, hidden), jnp.float32) * 0.05,
        "eb1": jnp.zeros((1, hidden), jnp.float32),
        "ew2": jax.random.normal(ks[1], (hidden, num_features), jnp.float32) * 0.05,
        "eb2": jnp.zeros((1, num_features), jnp.float32),
        # clustering layer weight: (num_clusters, num_features), xavier_uniform
        "cw": _xavier_uniform(ks[2], (num_clusters, num_features)),
        # decoder: F -> H -> D
        "dw1": jax.random.normal(ks[3], (num_features, hidden), jnp.float32) * 0.05,
        "db1": jnp.zeros((1, hidden), jnp.float32),
        "dw2": jax.random.normal(ks[4], (hidden, input_dim), jnp.float32) * 0.05,
        "db2": jnp.zeros((1, input_dim), jnp.float32),
    }


def reference(x, params):
    """Pure-JAX (f32) mirror of the PyTorch forward, for correctness checking."""
    h = jnp.maximum(x @ params["ew1"] + params["eb1"], 0.0)
    feats = h @ params["ew2"] + params["eb2"]
    diff = feats[:, None, :] - params["cw"][None, :, :]
    dist = jnp.sum(diff * diff, axis=2)
    q = 1.0 / (1.0 + dist / ALPHA)
    q = q ** ((ALPHA + 1.0) / 2.0)
    q = q / jnp.sum(q, axis=1, keepdims=True)
    hd = jnp.maximum(feats @ params["dw1"] + params["db1"], 0.0)
    out = hd @ params["dw2"] + params["db2"]
    return out, feats, q


if __name__ == "__main__":
    B, D, H, F, K = 2, 64, 32, 10, 10
    key = jax.random.PRNGKey(0)
    kx, kp = jax.random.split(key)
    x = jax.random.normal(kx, (B, D), jnp.float32)
    params = init_params(kp, D, H, F, K)

    output, features, clusters = deep_embedded_clustering(x, params)
    jax.block_until_ready((output, features, clusters))

    # shape checks
    assert output.shape == (B, D)
    assert features.shape == (B, F)
    assert clusters.shape == (B, K)

    # numerical checks vs the f32 reference (bf16 MXU operands -> loosened tolerances)
    ref_out, ref_feat, ref_q = reference(x, params)
    assert jnp.allclose(features, ref_feat, atol=1e-2, rtol=1e-2)
    assert jnp.allclose(output, ref_out, atol=5e-3, rtol=2e-2)
    assert jnp.allclose(clusters, ref_q, atol=5e-3, rtol=5e-3)
    # exact normalization: rows of q sum to 1 within f32 rounding
    assert jnp.allclose(jnp.sum(clusters, axis=1), 1.0, atol=1e-4)

    print("KERNEL_OK")
</pallas_src>

<mosaic_0001>
module attributes {stable_mosaic.version = 11 : i64} {
  func.func @_dec_kernel(%arg0: i32, %arg1: memref<2x64xf32, #tpu.memory_space<vmem>>, %arg2: memref<64x32xbf16, #tpu.memory_space<vmem>>, %arg3: memref<1x32xf32, #tpu.memory_space<vmem>>, %arg4: memref<32x10xbf16, #tpu.memory_space<vmem>>, %arg5: memref<1x10xf32, #tpu.memory_space<vmem>>, %arg6: memref<10x10xf32, #tpu.memory_space<vmem>>, %arg7: memref<1x10xf32, #tpu.memory_space<vmem>>, %arg8: memref<10x32xbf16, #tpu.memory_space<vmem>>, %arg9: memref<1x32xf32, #tpu.memory_space<vmem>>, %arg10: memref<32x64xbf16, #tpu.memory_space<vmem>>, %arg11: memref<1x64xf32, #tpu.memory_space<vmem>>, %arg12: memref<2x128xf32, #tpu.memory_space<vmem>>) attributes {dimension_semantics = [#tpu.dimension_semantics<parallel>], iteration_bounds = array<i64: 1>, scalar_prefetch = 0 : i64, scratch_operands = 0 : i64, tpu.core_type = #tpu.core_type<tc>, window_params = [{transform_indices = @transform_0, window_bounds = array<i64: 2, 64>}, {pipeline_mode = #tpu.pipeline_mode<synchronous>, transform_indices = @transform_1, window_bounds = array<i64: 64, 32>}, {pipeline_mode = #tpu.pipeline_mode<synchronous>, transform_indices = @transform_2, window_bounds = array<i64: 1, 32>}, {pipeline_mode = #tpu.pipeline_mode<synchronous>, transform_indices = @transform_3, window_bounds = array<i64: 32, 10>}, {pipeline_mode = #tpu.pipeline_mode<synchronous>, transform_indices = @transform_4, window_bounds = array<i64: 1, 10>}, {pipeline_mode = #tpu.pipeline_mode<synchronous>, transform_indices = @transform_5, window_bounds = array<i64: 10, 10>}, {pipeline_mode = #tpu.pipeline_mode<synchronous>, transform_indices = @transform_6, window_bounds = array<i64: 1, 10>}, {pipeline_mode = #tpu.pipeline_mode<synchronous>, transform_indices = @transform_7, window_bounds = array<i64: 10, 32>}, {pipeline_mode = #tpu.pipeline_mode<synchronous>, transform_indices = @transform_8, window_bounds = array<i64: 1, 32>}, {pipeline_mode = #tpu.pipeline_mode<synchronous>, transform_indices = @transform_9, window_bounds = array<i64: 32, 64>}, {pipeline_mode = #tpu.pipeline_mode<synchronous>, transform_indices = @transform_10, window_bounds = array<i64: 1, 64>}, {transform_indices = @transform_11, window_bounds = array<i64: 2, 128>}]} {
    %c0 = arith.constant 0 : index
    %c0_0 = arith.constant 0 : index
    %0 = vector.load %arg1[%c0, %c0_0] : memref<2x64xf32, #tpu.memory_space<vmem>>, vector<2x64xf32>
    %1 = arith.truncf %0 : vector<2x64xf32> to vector<2x64xbf16>
    %c0_1 = arith.constant 0 : index
    %c0_2 = arith.constant 0 : index
    %2 = vector.load %arg2[%c0_1, %c0_2] : memref<64x32xbf16, #tpu.memory_space<vmem>>, vector<64x32xbf16>
    %cst = arith.constant dense<0.000000e+00> : vector<2x32xf32>
    %3 = tpu.matmul %1, %2, %cst {dimension_numbers = #tpu.dot_dimension_numbers<[1], [0], [0], [1], [0, 0, 1, 1], [], []>} : vector<2x64xbf16>, vector<64x32xbf16>, vector<2x32xf32> -> vector<2x32xf32>
    %c0_3 = arith.constant 0 : index
    %c0_4 = arith.constant 0 : index
    %4 = vector.load %arg3[%c0_3, %c0_4] : memref<1x32xf32, #tpu.memory_space<vmem>>, vector<1x32xf32>
    %5 = vector.broadcast %4 : vector<1x32xf32> to vector<2x32xf32>
    %6 = arith.addf %3, %5 : vector<2x32xf32>
    %cst_5 = arith.constant 0.000000e+00 : f32
    %7 = vector.broadcast %cst_5 : f32 to vector<2x32xf32>
    %8 = arith.maximumf %6, %7 : vector<2x32xf32>
    %9 = arith.truncf %8 : vector<2x32xf32> to vector<2x32xbf16>
    %c0_6 = arith.constant 0 : index
    %c0_7 = arith.constant 0 : index
    %10 = vector.load %arg4[%c0_6, %c0_7] : memref<32x10xbf16, #tpu.memory_space<vmem>>, vector<32x10xbf16>
    %cst_8 = arith.constant dense<0.000000e+00> : vector<2x10xf32>
    %11 = tpu.matmul %9, %10, %cst_8 {dimension_numbers = #tpu.dot_dimension_numbers<[1], [0], [0], [1], [0, 0, 1, 1], [], []>} : vector<2x32xbf16>, vector<32x10xbf16>, vector<2x10xf32> -> vector<2x10xf32>
    %c0_9 = arith.constant 0 : index
    %c0_10 = arith.constant 0 : index
    %12 = vector.load %arg5[%c0_9, %c0_10] : memref<1x10xf32, #tpu.memory_space<vmem>>, vector<1x10xf32>
    %13 = vector.broadcast %12 : vector<1x10xf32> to vector<2x10xf32>
    %14 = arith.addf %11, %13 : vector<2x10xf32>
    %15 = arith.mulf %14, %14 : vector<2x10xf32>
    %cst_11 = arith.constant dense<0.000000e+00> : vector<2xf32>
    %16 = vector.multi_reduction <add>, %15, %cst_11 [1] : vector<2x10xf32> to vector<2xf32>
    %17 = vector.shape_cast %16 : vector<2xf32> to vector<2x1xf32>
    %c0_12 = arith.constant 0 : index
    %c0_13 = arith.constant 0 : index
    %18 = vector.load %arg6[%c0_12, %c0_13] : memref<10x10xf32, #tpu.memory_space<vmem>>, vector<10x10xf32>
    %cst_14 = arith.constant dense<0.000000e+00> : vector<2x10xf32>
    %19 = tpu.matmul %14, %18, %cst_14 {dimension_numbers = #tpu.dot_dimension_numbers<[1], [0], [0], [1], [0, 0, 1, 1], [], []>} : vector<2x10xf32>, vector<10x10xf32>, vector<2x10xf32> -> vector<2x10xf32>
    %cst_15 = arith.constant 2.000000e+00 : f32
    %20 = vector.broadcast %cst_15 : f32 to vector<2x10xf32>
    %21 = arith.mulf %20, %19 : vector<2x10xf32>
    %22 = vector.broadcast %17 : vector<2x1xf32> to vector<2x10xf32>
    %23 = arith.subf %22, %21 : vector<2x10xf32>
    %c0_16 = arith.constant 0 : index
    %c0_17 = arith.constant 0 : index
    %24 = vector.load %arg7[%c0_16, %c0_17] : memref<1x10xf32, #tpu.memory_space<vmem>>, vector<1x10xf32>
    %25 = vector.broadcast %24 : vector<1x10xf32> to vector<2x10xf32>
    %26 = arith.addf %23, %25 : vector<2x10xf32>
    %cst_18 = arith.constant 0.000000e+00 : f32
    %27 = vector.broadcast %cst_18 : f32 to vector<2x10xf32>
    %28 = arith.maximumf %26, %27 : vector<2x10xf32>
    %cst_19 = arith.constant 1.000000e+00 : f32
    %29 = vector.broadcast %cst_19 : f32 to vector<2x10xf32>
    %30 = arith.addf %29, %28 : vector<2x10xf32>
    %cst_20 = arith.constant 1.000000e+00 : f32
    %31 = vector.broadcast %cst_20 : f32 to vector<2x10xf32>
    %32 = arith.divf %31, %30 : vector<2x10xf32>
    %cst_21 = arith.constant dense<0.000000e+00> : vector<2xf32>
    %33 = vector.multi_reduction <add>, %32, %cst_21 [1] : vector<2x10xf32> to vector<2xf32>
    %34 = vector.shape_cast %33 : vector<2xf32> to vector<2x1xf32>
    %35 = vector.broadcast %34 : vector<2x1xf32> to vector<2x10xf32>
    %36 = arith.divf %32, %35 : vector<2x10xf32>
    %37 = arith.truncf %14 : vector<2x10xf32> to vector<2x10xbf16>
    %c0_22 = arith.constant 0 : index
    %c0_23 = arith.constant 0 : index
    %38 = vector.load %arg8[%c0_22, %c0_23] : memref<10x32xbf16, #tpu.memory_space<vmem>>, vector<10x32xbf16>
    %cst_24 = arith.constant dense<0.000000e+00> : vector<2x32xf32>
    %39 = tpu.matmul %37, %38, %cst_24 {dimension_numbers = #tpu.dot_dimension_numbers<[1], [0], [0], [1], [0, 0, 1, 1], [], []>} : vector<2x10xbf16>, vector<10x32xbf16>, vector<2x32xf32> -> vector<2x32xf32>
    %c0_25 = arith.constant 0 : index
    %c0_26 = arith.constant 0 : index
    %40 = vector.load %arg9[%c0_25, %c0_26] : memref<1x32xf32, #tpu.memory_space<vmem>>, vector<1x32xf32>
    %41 = vector.broadcast %40 : vector<1x32xf32> to vector<2x32xf32>
    %42 = arith.addf %39, %41 : vector<2x32xf32>
    %cst_27 = arith.constant 0.000000e+00 : f32
    %43 = vector.broadcast %cst_27 : f32 to vector<2x32xf32>
    %44 = arith.maximumf %42, %43 : vector<2x32xf32>
    %45 = arith.truncf %44 : vector<2x32xf32> to vector<2x32xbf16>
    %c0_28 = arith.constant 0 : index
    %c0_29 = arith.constant 0 : index
    %46 = vector.load %arg10[%c0_28, %c0_29] : memref<32x64xbf16, #tpu.memory_space<vmem>>, vector<32x64xbf16>
    %cst_30 = arith.constant dense<0.000000e+00> : vector<2x64xf32>
    %47 = tpu.matmul %45, %46, %cst_30 {dimension_numbers = #tpu.dot_dimension_numbers<[1], [0], [0], [1], [0, 0, 1, 1], [], []>} : vector<2x32xbf16>, vector<32x64xbf16>, vector<2x64xf32> -> vector<2x64xf32>
    %c0_31 = arith.constant 0 : index
    %c0_32 = arith.constant 0 : index
    %48 = vector.load %arg11[%c0_31, %c0_32] : memref<1x64xf32, #tpu.memory_space<vmem>>, vector<1x64xf32>
    %49 = vector.broadcast %48 : vector<1x64xf32> to vector<2x64xf32>
    %50 = arith.addf %47, %49 : vector<2x64xf32>
    %c0_33 = arith.constant 0 : index
    %c0_34 = arith.constant 0 : index
    %51 = vector.load %arg12[%c0_33, %c0_34] : memref<2x128xf32, #tpu.memory_space<vmem>>, vector<2x64xf32>
    tpu.vector_store %arg12[%c0_33, %c0_34], %50 {strides = array<i32>} : memref<2x128xf32, #tpu.memory_space<vmem>>, vector<2x64xf32>,
    %c0_35 = arith.constant 0 : index
    %c64 = arith.constant 64 : index
    %52 = vector.load %arg12[%c0_35, %c64] : memref<2x128xf32, #tpu.memory_space<vmem>>, vector<2x10xf32>
    tpu.vector_store %arg12[%c0_35, %c64], %14 {strides = array<i32>} : memref<2x128xf32, #tpu.memory_space<vmem>>, vector<2x10xf32>,
    %c0_36 = arith.constant 0 : index
    %c74 = arith.constant 74 : index
    %53 = vector.load %arg12[%c0_36, %c74] : memref<2x128xf32, #tpu.memory_space<vmem>>, vector<2x10xf32>
    tpu.vector_store %arg12[%c0_36, %c74], %36 {strides = array<i32>} : memref<2x128xf32, #tpu.memory_space<vmem>>, vector<2x10xf32>,
    return
  }
  func.func @transform_0(%arg0: i32) -> (i32, i32) {
    %c0_i32 = arith.constant 0 : i32
    %c0_i32_0 = arith.constant 0 : i32
    return %arg0, %c0_i32 : i32, i32
  }
  func.func @transform_1(%arg0: i32) -> (i32, i32) {
    %c0_i32 = arith.constant 0 : i32
    %c0_i32_0 = arith.constant 0 : i32
    %c0_i32_1 = arith.constant 0 : i32
    return %c0_i32, %c0_i32_0 : i32, i32
  }
  func.func @transform_2(%arg0: i32) -> (i32, i32) {
    %c0_i32 = arith.constant 0 : i32
    %c0_i32_0 = arith.constant 0 : i32
    %c0_i32_1 = arith.constant 0 : i32
    return %c0_i32, %c0_i32_0 : i32, i32
  }
  func.func @transform_3(%arg0: i32) -> (i32, i32) {
    %c0_i32 = arith.constant 0 : i32
    %c0_i32_0 = arith.constant 0 : i32
    %c0_i32_1 = arith.constant 0 : i32
    return %c0_i32, %c0_i32_0 : i32, i32
  }
  func.func @transform_4(%arg0: i32) -> (i32, i32) {
    %c0_i32 = arith.constant 0 : i32
    %c0_i32_0 = arith.constant 0 : i32
    %c0_i32_1 = arith.constant 0 : i32
    return %c0_i32, %c0_i32_0 : i32, i32
  }
  func.func @transform_5(%arg0: i32) -> (i32, i32) {
    %c0_i32 = arith.constant 0 : i32
    %c0_i32_0 = arith.constant 0 : i32
    %c0_i32_1 = arith.constant 0 : i32
    return %c0_i32, %c0_i32_0 : i32, i32
  }
  func.func @transform_6(%arg0: i32) -> (i32, i32) {
    %c0_i32 = arith.constant 0 : i32
    %c0_i32_0 = arith.constant 0 : i32
    %c0_i32_1 = arith.constant 0 : i32
    return %c0_i32, %c0_i32_0 : i32, i32
  }
  func.func @transform_7(%arg0: i32) -> (i32, i32) {
    %c0_i32 = arith.constant 0 : i32
    %c0_i32_0 = arith.constant 0 : i32
    %c0_i32_1 = arith.constant 0 : i32
    return %c0_i32, %c0_i32_0 : i32, i32
  }
  func.func @transform_8(%arg0: i32) -> (i32, i32) {
    %c0_i32 = arith.constant 0 : i32
    %c0_i32_0 = arith.constant 0 : i32
    %c0_i32_1 = arith.constant 0 : i32
    return %c0_i32, %c0_i32_0 : i32, i32
  }
  func.func @transform_9(%arg0: i32) -> (i32, i32) {
    %c0_i32 = arith.constant 0 : i32
    %c0_i32_0 = arith.constant 0 : i32
    %c0_i32_1 = arith.constant 0 : i32
    return %c0_i32, %c0_i32_0 : i32, i32
  }
  func.func @transform_10(%arg0: i32) -> (i32, i32) {
    %c0_i32 = arith.constant 0 : i32
    %c0_i32_0 = arith.constant 0 : i32
    %c0_i32_1 = arith.constant 0 : i32
    return %c0_i32, %c0_i32_0 : i32, i32
  }
  func.func @transform_11(%arg0: i32) -> (i32, i32) {
    %c0_i32 = arith.constant 0 : i32
    %c0_i32_0 = arith.constant 0 : i32
    return %arg0, %c0_i32 : i32, i32
  }
}

</mosaic_0001>

<llo_original>
// kernel: deep_embedded_clustering.1
$region0: #{deep_embedded_clustering.1}
  #allocation0 [shape = 'u32[]', space=smem, size = 0x4, offset = 0x4, fixed_abs, tag = 'smem constant byte address 0x4 - core index']
  #allocation1 [shape = 'u32[144,128]{1,0:T(1,128)}', space=vmem, size = 0x12000, scoped, tag = 'internal scratch']
  %s0 = inlined_call_operand.vmem [shape: f32[2,64], index: 0, kind: input, shape index: {}]
  %s1 = inlined_call_operand.vmem [shape: bf16[64,32], index: 1, kind: input, shape index: {}]
  %s2 = inlined_call_operand.vmem [shape: f32[1,32], index: 2, kind: input, shape index: {}]
  %s3 = inlined_call_operand.vmem [shape: bf16[32,10], index: 3, kind: input, shape index: {}]
  %s4 = inlined_call_operand.vmem [shape: f32[1,10], index: 4, kind: input, shape index: {}]
  %s5 = inlined_call_operand.vmem [shape: f32[10,10], index: 5, kind: input, shape index: {}]
  %s6 = inlined_call_operand.vmem [shape: f32[1,10], index: 6, kind: input, shape index: {}]
  %s7 = inlined_call_operand.vmem [shape: bf16[10,32], index: 7, kind: input, shape index: {}]
  %s8 = inlined_call_operand.vmem [shape: f32[1,32], index: 8, kind: input, shape index: {}]
  %s9 = inlined_call_operand.vmem [shape: bf16[32,64], index: 9, kind: input, shape index: {}]
  %s10 = inlined_call_operand.vmem [shape: f32[1,64], index: 10, kind: input, shape index: {}]
  %s11 = inlined_call_operand.vmem [shape: f32[2,128], index: 11, kind: output, shape index: {}]
  %s12 = sld [smem:[#allocation0]]
  $region54: #{deep_embedded_clustering.1} parent=0
    _
  %s14 = ssub.s32 1, %s12
  %s15 = scalar_select 0, %s14, %s12
  // Predicated region
  $region2: #{deep_embedded_clustering.1} parent=0 // pred_check
    _
  $region3: #{deep_embedded_clustering.1} parent=0 // pred_check_branch
    %17 = sbr.rel (0) target = $region5
  $region4: #{deep_embedded_clustering.1} parent=0 // pred_region
    _
  $region5: #{deep_embedded_clustering.1} parent=0 // pred_fallthru
    _
  // Predicated region
  $region6: #{deep_embedded_clustering.1} parent=0 // pred_check
    _
  $region7: #{deep_embedded_clustering.1} parent=0 // pred_check_branch
    %19 = sbr.rel (0) target = $region9
  $region8: #{deep_embedded_clustering.1} parent=0 // pred_region
    _
  $region9: #{deep_embedded_clustering.1} parent=0 // pred_fallthru
    _
  // Predicated region
  $region10: #{deep_embedded_clustering.1} parent=0 // pred_check
    _
  $region11: #{deep_embedded_clustering.1} parent=0 // pred_check_branch
    %21 = sbr.rel (0) target = $region13
  $region12: #{deep_embedded_clustering.1} parent=0 // pred_region
    _
  $region13: #{deep_embedded_clustering.1} parent=0 // pred_fallthru
    _
  // Predicated region
  $region14: #{deep_embedded_clustering.1} parent=0 // pred_check
    _
  $region15: #{deep_embedded_clustering.1} parent=0 // pred_check_branch
    %23 = sbr.rel (0) target = $region17
  $region16: #{deep_embedded_clustering.1} parent=0 // pred_region
    _
  $region17: #{deep_embedded_clustering.1} parent=0 // pred_fallthru
    _
  // Predicated region
  $region18: #{deep_embedded_clustering.1} parent=0 // pred_check
    _
  $region19: #{deep_embedded_clustering.1} parent=0 // pred_check_branch
    %25 = sbr.rel (0) target = $region21
  $region20: #{deep_embedded_clustering.1} parent=0 // pred_region
    _
  $region21: #{deep_embedded_clustering.1} parent=0 // pred_fallthru
    _
  // Predicated region
  $region22: #{deep_embedded_clustering.1} parent=0 // pred_check
    _
  $region23: #{deep_embedded_clustering.1} parent=0 // pred_check_branch
    %27 = sbr.rel (0) target = $region25
  $region24: #{deep_embedded_clustering.1} parent=0 // pred_region
    _
  $region25: #{deep_embedded_clustering.1} parent=0 // pred_fallthru
    _
  // Predicated region
  $region26: #{deep_embedded_clustering.1} parent=0 // pred_check
    _
  $region27: #{deep_embedded_clustering.1} parent=0 // pred_check_branch
    %29 = sbr.rel (0) target = $region29
  $region28: #{deep_embedded_clustering.1} parent=0 // pred_region
    _
  $region29: #{deep_embedded_clustering.1} parent=0 // pred_fallthru
    _
  // Predicated region
  $region30: #{deep_embedded_clustering.1} parent=0 // pred_check
    _
  $region31: #{deep_embedded_clustering.1} parent=0 // pred_check_branch
    %31 = sbr.rel (0) target = $region33
  $region32: #{deep_embedded_clustering.1} parent=0 // pred_region
    _
  $region33: #{deep_embedded_clustering.1} parent=0 // pred_fallthru
    _
  // Predicated region
  $region34: #{deep_embedded_clustering.1} parent=0 // pred_check
    _
  $region35: #{deep_embedded_clustering.1} parent=0 // pred_check_branch
    %33 = sbr.rel (0) target = $region37
  $region36: #{deep_embedded_clustering.1} parent=0 // pred_region
    _
  $region37: #{deep_embedded_clustering.1} parent=0 // pred_fallthru
    _
  // Predicated region
  $region38: #{deep_embedded_clustering.1} parent=0 // pred_check
    _
  $region39: #{deep_embedded_clustering.1} parent=0 // pred_check_branch
    %35 = sbr.rel (0) target = $region41
  $region40: #{deep_embedded_clustering.1} parent=0 // pred_region
    _
  $region41: #{deep_embedded_clustering.1} parent=0 // pred_fallthru
    _
  // Predicated region
  $region42: #{deep_embedded_clustering.1} parent=0 // pred_check
    _
  $region43: #{deep_embedded_clustering.1} parent=0 // pred_check_branch
    %37 = sbr.rel (0) target = $region45
  $region44: #{deep_embedded_clustering.1} parent=0 // pred_region
    _
  $region45: #{deep_embedded_clustering.1} parent=0 // pred_fallthru
    _
  %v39 = vld [vmem:[%s0] sm:$0x3]
  %v40 = vpack.c.bf16 %v39, %v39
  %v41 = vld [vmem:[%s1] sm:$0xf]
  %v42 = vld [vmem:[%s1 + $0x4] sm:$0xf]
  %v43 = vld [vmem:[%s1 + $0x8] sm:$0xf]
  %v44 = vld [vmem:[%s1 + $0xc] sm:$0xf]
  %v45 = vld [vmem:[%s1 + $0x10] sm:$0xf]
  %v46 = vld [vmem:[%s1 + $0x14] sm:$0xf]
  %v47 = vld [vmem:[%s1 + $0x18] sm:$0xf]
  %v48 = vld [vmem:[%s1 + $0x1c] sm:$0xf]
  %v49 = vld [vmem:[%s2] sm:$0x1]
  %v51 = vlaneseq
  %v52 = vshrl.u32 %v51, 7
  %v53 = vsub.s32 0, %v52
  %v54 = vrot.slane %v49, %v53
  %v64 = vunpack.c.l.b16 %v41
  %v65 = vunpack.c.l.b16 %v42
  %v66 = vunpack.c.l.b16 %v43
  %v67 = vunpack.c.l.b16 %v44
  %v68 = vunpack.c.l.b16 %v45
  %v69 = vunpack.c.l.b16 %v46
  %v70 = vunpack.c.l.b16 %v47
  %v71 = vunpack.c.l.b16 %v48
  %v72 = vpack.c.b16 %v65, %v64
  %v73 = vpack.c.b16 %v67, %v66
  %v74 = vpack.c.b16 %v69, %v68
  %v75 = vpack.c.b16 %v71, %v70
  %vm80 = vcmask 523264
  %v82 = vsel %vm80, %v40, 0
  %84 = vmatprep.subr.bf16.mxu0 0
  %85 = vmatpush1.bf16.msra.mxu0 %v72
  %86 = vmatprep.subr.bf16.mxu0 0
  %87 = vmatpush1.bf16.msra.mxu0 %v73
  %88 = vmatprep.subr.bf16.mxu0 0
  %89 = vmatpush1.bf16.msra.mxu0 %v74
  %90 = vmatprep.subr.bf16.mxu0 0
  %91 = vmatpush1.bf16.msra.mxu0 %v75
  %92 = vmatprep.subr.bf16.mxu0 0
  %93 = vmatpush1.bf16.msra.mxu0 0
  %94 = vmatprep.subr.bf16.mxu0 0
  %95 = vmatpush1.bf16.msra.mxu0 0
  %96 = vmatprep.subr.bf16.mxu0 0
  %97 = vmatpush1.bf16.msra.mxu0 0
  %98 = vmatprep.subr.bf16.mxu0 0
  %99 = vmatpush1.bf16.msra.mxu0 0
  %100 = vmatprep.subr.bf16.mxu0 0
  %101 = vmatpush1.bf16.msra.mxu0 0
  %102 = vmatprep.subr.bf16.mxu0 0
  %103 = vmatpush1.bf16.msra.mxu0 0
  %104 = vmatprep.subr.bf16.mxu0 0
  %105 = vmatpush1.bf16.msra.mxu0 0
  %106 = vmatprep.subr.bf16.mxu0 0
  %107 = vmatpush1.bf16.msra.mxu0 0
  %108 = vmatprep.subr.bf16.mxu0 0
  %109 = vmatpush1.bf16.msra.mxu0 0
  %110 = vmatprep.subr.bf16.mxu0 0
  %111 = vmatpush1.bf16.msra.mxu0 0
  %112 = vmatprep.subr.bf16.mxu0 0
  %113 = vmatpush1.bf16.msra.mxu0 0
  %114 = vmatprep.subr.bf16.mxu0 0
  %115 = vmatpush1.bf16.msra.mxu0 0
  %116 = vmatprep.mubr.bf16.mxu0 0
  %117 = vmatmul.mubr.bf16.gmra.mrb[0].mxu0 %v82
  %v118 = vpop.f32.mrb[0].mxu0
  %v119 = vadd.f32 %v54, %v118
  %v120 = vpop.f32.mrb[0].mxu0
  %v121 = vpop.f32.mrb[0].mxu0
  %v122 = vpop.f32.mrb[0].mxu0
  %123 = vdwg.mxu0
  %v124 = vmax.f32 %v119, 0.0
  %v125 = vpack.c.bf16 %v124, %v124
  %v126 = vld [vmem:[%s3] sm:$0xf]
  %v127 = vld [vmem:[%s3 + $0x4] sm:$0xf]
  %v128 = vld [vmem:[%s3 + $0x8] sm:$0xf]
  %v129 = vld [vmem:[%s3 + $0xc] sm:$0xf]
  %v130 = vld [vmem:[%s4] sm:$0x1]
  %v132 = vlaneseq
  %v133 = vshrl.u32 %v132, 7
  %v134 = vsub.s32 0, %v133
  %v135 = vrot.slane %v130, %v134
  %v141 = vunpack.c.l.b16 %v126
  %v142 = vunpack.c.l.b16 %v127
  %v143 = vunpack.c.l.b16 %v128
  %v144 = vunpack.c.l.b16 %v129
  %v145 = vpack.c.b16 %v142, %v141
  %v146 = vpack.c.b16 %v144, %v143
  %vm149 = vcmask 261120
  %v151 = vsel %vm149, %v125, 0
  %153 = vmatprep.subr.bf16.mxu0 0
  %154 = vmatpush1.bf16.msra.mxu0 %v145
  %155 = vmatprep.subr.bf16.mxu0 0
  %156 = vmatpush1.bf16.msra.mxu0 %v146
  %157 = vmatprep.subr.bf16.mxu0 0
  %158 = vmatpush1.bf16.msra.mxu0 0
  %159 = vmatprep.subr.bf16.mxu0 0
  %160 = vmatpush1.bf16.msra.mxu0 0
  %161 = vmatprep.subr.bf16.mxu0 0
  %162 = vmatpush1.bf16.msra.mxu0 0
  %163 = vmatprep.subr.bf16.mxu0 0
  %164 = vmatpush1.bf16.msra.mxu0 0
  %165 = vmatprep.subr.bf16.mxu0 0
  %166 = vmatpush1.bf16.msra.mxu0 0
  %167 = vmatprep.subr.bf16.mxu0 0
  %168 = vmatpush1.bf16.msra.mxu0 0
  %169 = vmatprep.subr.bf16.mxu0 0
  %170 = vmatpush1.bf16.msra.mxu0 0
  %171 = vmatprep.subr.bf16.mxu0 0
  %172 = vmatpush1.bf16.msra.mxu0 0
  %173 = vmatprep.subr.bf16.mxu0 0
  %174 = vmatpush1.bf16.msra.mxu0 0
  %175 = vmatprep.subr.bf16.mxu0 0
  %176 = vmatpush1.bf16.msra.mxu0 0
  %177 = vmatprep.subr.bf16.mxu0 0
  %178 = vmatpush1.bf16.msra.mxu0 0
  %179 = vmatprep.subr.bf16.mxu0 0
  %180 = vmatpush1.bf16.msra.mxu0 0
  %181 = vmatprep.subr.bf16.mxu0 0
  %182 = vmatpush1.bf16.msra.mxu0 0
  %183 = vmatprep.subr.bf16.mxu0 0
  %184 = vmatpush1.bf16.msra.mxu0 0
  %185 = vmatprep.mubr.bf16.mxu0 0
  %186 = vmatmul.mubr.bf16.gmra.mrb[0].mxu0 %v151
  %v187 = vpop.f32.mrb[0].mxu0
  %v188 = vadd.f32 %v135, %v187
  %v189 = vpop.f32.mrb[0].mxu0
  %v190 = vpop.f32.mrb[0].mxu0
  %v191 = vpop.f32.mrb[0].mxu0
  %192 = vdwg.mxu0
  %v193 = vmul.f32 %v188, %v188
  %vm194 = vcmask 74752
  %v195 = vsel %vm194, %v193, 0.0
  %196 = vadd.xlane.f32.xlu0 %v195
  %v197 = vpop.xlane.xlu0 %196
  %v198 = vld [vmem:[%s5] sm:$0xff]
  %v199 = vld [vmem:[%s5 + $0x8] sm:$0x3]
  %vm200 = vcmask 80896
  %v202 = vsel %vm200, %v188, 0
  %vm204 = vcmask 1041408
  %v206 = vsel %vm204, %v199, 0
  %208 = vmatprep.subr.mxu0 0.0
  %209 = vmatpush1.msra.mxu0 %v198
  %210 = vmatprep.subr.mxu0 0.0
  %211 = vmatpush1.msra.mxu0 %v206
  %212 = vmatprep.subr.mxu0 0.0
  %213 = vmatpush1.msra.mxu0 0.0
  %214 = vmatprep.subr.mxu0 0.0
  %215 = vmatpush1.msra.mxu0 0.0
  %216 = vmatprep.subr.mxu0 0.0
  %217 = vmatpush1.msra.mxu0 0.0
  %218 = vmatprep.subr.mxu0 0.0
  %219 = vmatpush1.msra.mxu0 0.0
  %220 = vmatprep.subr.mxu0 0.0
  %221 = vmatpush1.msra.mxu0 0.0
  %222 = vmatprep.subr.mxu0 0.0
  %223 = vmatpush1.msra.mxu0 0.0
  %224 = vmatprep.subr.mxu0 0.0
  %225 = vmatpush1.msra.mxu0 0.0
  %226 = vmatprep.subr.mxu0 0.0
  %227 = vmatpush1.msra.mxu0 0.0
  %228 = vmatprep.subr.mxu0 0.0
  %229 = vmatpush1.msra.mxu0 0.0
  %230 = vmatprep.subr.mxu0 0.0
  %231 = vmatpush1.msra.mxu0 0.0
  %232 = vmatprep.subr.mxu0 0.0
  %233 = vmatpush1.msra.mxu0 0.0
  %234 = vmatprep.subr.mxu0 0.0
  %235 = vmatpush1.msra.mxu0 0.0
  %236 = vmatprep.subr.mxu0 0.0
  %237 = vmatpush1.msra.mxu0 0.0
  %238 = vmatprep.subr.mxu0 0.0
  %239 = vmatpush1.msra.mxu0 0.0
  %240 = vmatprep.subr.mxu0 0.0
  %241 = vmatpush1.msra.mxu0 0.0
  %242 = vmatprep.subr.mxu0 0.0
  %243 = vmatpush1.msra.mxu0 0.0
  %244 = vmatprep.subr.mxu0 0.0
  %245 = vmatpush1.msra.mxu0 0.0
  %246 = vmatprep.subr.mxu0 0.0
  %247 = vmatpush1.msra.mxu0 0.0
  %248 = vmatprep.subr.mxu0 0.0
  %249 = vmatpush1.msra.mxu0 0.0
  %250 = vmatprep.subr.mxu0 0.0
  %251 = vmatpush1.msra.mxu0 0.0
  %252 = vmatprep.subr.mxu0 0.0
  %253 = vmatpush1.msra.mxu0 0.0
  %254 = vmatprep.subr.mxu0 0.0
  %255 = vmatpush1.msra.mxu0 0.0
  %256 = vmatprep.subr.mxu0 0.0
  %257 = vmatpush1.msra.mxu0 0.0
  %258 = vmatprep.subr.mxu0 0.0
  %259 = vmatpush1.msra.mxu0 0.0
  %260 = vmatprep.subr.mxu0 0.0
  %261 = vmatpush1.msra.mxu0 0.0
  %262 = vmatprep.subr.mxu0 0.0
  %263 = vmatpush1.msra.mxu0 0.0
  %264 = vmatprep.subr.mxu0 0.0
  %265 = vmatpush1.msra.mxu0 0.0
  %266 = vmatprep.subr.mxu0 0.0
  %267 = vmatpush1.msra.mxu0 0.0
  %268 = vmatprep.subr.mxu0 0.0
  %269 = vmatpush1.msra.mxu0 0.0
  %270 = vmatprep.subr.mxu0 0.0
  %271 = vmatpush1.msra.mxu0 0.0
  %272 = vmatprep.mubr.f32.mxu0 0.0
  %273 = vmatmul.mubr.f32.gmra.mrb[0].mxu0 %v202
  %v274 = vpop.f32.mrb[0].mxu0
  %v275 = vadd.f32 0.0, %v274
  %v276 = vpop.f32.mrb[0].mxu0
  %277 = vdwg.mxu0
  %v278 = vmul.f32 %v275, 2.0
  %v279 = vsub.f32 %v197, %v278
  %v280 = vld [vmem:[%s6] sm:$0x1]
  %v282 = vlaneseq
  %v283 = vshrl.u32 %v282, 7
  %v284 = vsub.s32 0, %v283
  %v285 = vrot.slane %v280, %v284
  %v287 = vadd.f32 %v279, %v285
  %v288 = vmax.f32 %v287, 0.0
  %v289 = vadd.f32 %v288, 1.0
  %v290 = vrcp.pop %v289
  %v291 = vmul.f32 1.0, %v290
  %v292 = vsel %vm194, %v291, 0.0
  %293 = vadd.xlane.f32.xlu0 %v292
  %v294 = vpop.xlane.xlu0 %293
  %v295 = vrcp.pop %v294
  %v296 = vmul.f32 %v291, %v295
  %v297 = vpack.c.bf16 %v188, %v188
  %v298 = vld [vmem:[%s7] sm:$0xf]
  %v299 = vld [vmem:[%s7 + $0x4] sm:$0x1]
  %v300 = vld [vmem:[%s8] sm:$0x1]
  %v302 = vlaneseq
  %v303 = vshrl.u32 %v302, 7
  %v304 = vsub.s32 0, %v303
  %v305 = vrot.slane %v300, %v304
  %v309 = vunpack.c.l.b16 %v298
  %v310 = vunpack.c.l.b16 %v299
  %v311 = vpack.c.b16 %v310, %v309
  %v313 = vsel %vm200, %v297, 0
  %vm315 = vcmask 1044480
  %v317 = vsel %vm315, %v311, 0
  %319 = vmatprep.subr.bf16.mxu0 0
  %320 = vmatpush1.bf16.msra.mxu0 %v317
  %321 = vmatprep.subr.bf16.mxu0 0
  %322 = vmatpush1.bf16.msra.mxu0 0
  %323 = vmatprep.subr.bf16.mxu0 0
  %324 = vmatpush1.bf16.msra.mxu0 0
  %325 = vmatprep.subr.bf16.mxu0 0
  %326 = vmatpush1.bf16.msra.mxu0 0
  %327 = vmatprep.subr.bf16.mxu0 0
  %328 = vmatpush1.bf16.msra.mxu0 0
  %329 = vmatprep.subr.bf16.mxu0 0
  %330 = vmatpush1.bf16.msra.mxu0 0
  %331 = vmatprep.subr.bf16.mxu0 0
  %332 = vmatpush1.bf16.msra.mxu0 0
  %333 = vmatprep.subr.bf16.mxu0 0
  %334 = vmatpush1.bf16.msra.mxu0 0
  %335 = vmatprep.subr.bf16.mxu0 0
  %336 = vmatpush1.bf16.msra.mxu0 0
  %337 = vmatprep.subr.bf16.mxu0 0
  %338 = vmatpush1.bf16.msra.mxu0 0
  %339 = vmatprep.subr.bf16.mxu0 0
  %340 = vmatpush1.bf16.msra.mxu0 0
  %341 = vmatprep.subr.bf16.mxu0 0
  %342 = vmatpush1.bf16.msra.mxu0 0
  %343 = vmatprep.subr.bf16.mxu0 0
  %344 = vmatpush1.bf16.msra.mxu0 0
  %345 = vmatprep.subr.bf16.mxu0 0
  %346 = vmatpush1.bf16.msra.mxu0 0
  %347 = vmatprep.subr.bf16.mxu0 0
  %348 = vmatpush1.bf16.msra.mxu0 0
  %349 = vmatprep.subr.bf16.mxu0 0
  %350 = vmatpush1.bf16.msra.mxu0 0
  %351 = vmatprep.mubr.bf16.mxu0 0
  %352 = vmatmul.mubr.bf16.gmra.mrb[0].mxu0 %v313
  %v353 = vpop.f32.mrb[0].mxu0
  %v354 = vadd.f32 %v305, %v353
  %v355 = vpop.f32.mrb[0].mxu0
  %v356 = vpop.f32.mrb[0].mxu0
  %v357 = vpop.f32.mrb[0].mxu0
  %358 = vdwg.mxu0
  %v359 = vmax.f32 %v354, 0.0
  %v360 = vpack.c.bf16 %v359, %v359
  %v361 = vld [vmem:[%s9] sm:$0xf]
  %v362 = vld [vmem:[%s9 + $0x4] sm:$0xf]
  %v363 = vld [vmem:[%s9 + $0x8] sm:$0xf]
  %v364 = vld [vmem:[%s9 + $0xc] sm:$0xf]
  %v365 = vld [vmem:[%s10] sm:$0x1]
  %v367 = vlaneseq
  %v368 = vshrl.u32 %v367, 7
  %v369 = vsub.s32 0, %v368
  %v370 = vrot.slane %v365, %v369
  %v376 = vunpack.c.l.b16 %v361
  %v377 = vunpack.c.l.b16 %v362
  %v378 = vunpack.c.l.b16 %v363
  %v379 = vunpack.c.l.b16 %v364
  %v380 = vpack.c.b16 %v377, %v376
  %v381 = vpack.c.b16 %v379, %v378
  %v385 = vsel %vm149, %v360, 0
  %387 = vmatprep.subr.bf16.mxu0 0
  %388 = vmatpush1.bf16.msra.mxu0 %v380
  %389 = vmatprep.subr.bf16.mxu0 0
  %390 = vmatpush1.bf16.msra.mxu0 %v381
  %391 = vmatprep.subr.bf16.mxu0 0
  %392 = vmatpush1.bf16.msra.mxu0 0
  %393 = vmatprep.subr.bf16.mxu0 0
  %394 = vmatpush1.bf16.msra.mxu0 0
  %395 = vmatprep.subr.bf16.mxu0 0
  %396 = vmatpush1.bf16.msra.mxu0 0
  %397 = vmatprep.subr.bf16.mxu0 0
  %398 = vmatpush1.bf16.msra.mxu0 0
  %399 = vmatprep.subr.bf16.mxu0 0
  %400 = vmatpush1.bf16.msra.mxu0 0
  %401 = vmatprep.subr.bf16.mxu0 0
  %402 = vmatpush1.bf16.msra.mxu0 0
  %403 = vmatprep.subr.bf16.mxu0 0
  %404 = vmatpush1.bf16.msra.mxu0 0
  %405 = vmatprep.subr.bf16.mxu0 0
  %406 = vmatpush1.bf16.msra.mxu0 0
  %407 = vmatprep.subr.bf16.mxu0 0
  %408 = vmatpush1.bf16.msra.mxu0 0
  %409 = vmatprep.subr.bf16.mxu0 0
  %410 = vmatpush1.bf16.msra.mxu0 0
  %411 = vmatprep.subr.bf16.mxu0 0
  %412 = vmatpush1.bf16.msra.mxu0 0
  %413 = vmatprep.subr.bf16.mxu0 0
  %414 = vmatpush1.bf16.msra.mxu0 0
  %415 = vmatprep.subr.bf16.mxu0 0
  %416 = vmatpush1.bf16.msra.mxu0 0
  %417 = vmatprep.subr.bf16.mxu0 0
  %418 = vmatpush1.bf16.msra.mxu0 0
  %419 = vmatprep.mubr.bf16.mxu0 0
  %420 = vmatmul.mubr.bf16.gmra.mrb[0].mxu0 %v385
  %v421 = vpop.f32.mrb[0].mxu0
  %v422 = vadd.f32 %v370, %v421
  %v423 = vpop.f32.mrb[0].mxu0
  %v424 = vpop.f32.mrb[0].mxu0
  %v425 = vpop.f32.mrb[0].mxu0
  %426 = vdwg.mxu0
  %vm427 = vcmask 517120
  %428 = vst.msk [vmem:[%s11] sm:$0x3] %vm427, %v422
  %429 = vrot.lane.b32.xlu0 %v188, 64
  %v430 = vpop.permute.xlu0 %429
  %vm432 = vcmask 599552
  %433 = vst.msk [vmem:[%s11] sm:$0x3] %vm432, %v430
  %435 = vrot.lane.b32.xlu0 %v296, 74
  %v436 = vpop.permute.xlu0 %435
  %vm438 = vcmask 681552
  %439 = vst.msk [vmem:[%s11] sm:$0x3] %vm438, %v436
  // Predicated region
  $region46: #{deep_embedded_clustering.1} parent=0 // pred_check
    _
  $region47: #{deep_embedded_clustering.1} parent=0 // pred_check_branch
    %441 = sbr.rel (0) target = $region49
  $region48: #{deep_embedded_clustering.1} parent=0 // pred_region
    _
  $region49: #{deep_embedded_clustering.1} parent=0 // pred_fallthru
    _
  // Predicated region
  $region50: #{deep_embedded_clustering.1} parent=0 // pred_check
    _
  $region51: #{deep_embedded_clustering.1} parent=0 // pred_check_branch
    %443 = sbr.rel (0) target = $region53
  $region52: #{deep_embedded_clustering.1} parent=0 // pred_region
    _
  $region53: #{deep_embedded_clustering.1} parent=0 // pred_fallthru
    _

</llo_original>
